<compile_context>
chip_gen: v5e
topology: v5e:2x2
jax: 0.10.0
libtpu: 0.0.40
codegen_flags: <defaults>
</compile_context>

<pallas_src>
import jax
import jax.numpy as jnp
from jax.experimental import pallas as pl
from jax.experimental.pallas import tpu as pltpu


def perceptron_kernel(x_ref, w_ref, b_ref, o_ref):
    # x_ref: (TILE_B, D) VMEM  -- batch rows on sublanes, features on lanes
    # w_ref: (1, D)      VMEM  -- lane-dense weight row (PyTorch layout)
    # b_ref: (1, 1)      SMEM  -- scalar bias
    # o_ref: (1, TILE_B) VMEM  -- lane-dense output row for this batch tile
    x = x_ref[...].astype(jnp.float32)
    w = w_ref[...].astype(jnp.float32)
    # VPU elementwise multiply + per-row lane reduction (XLU). The kernel is
    # HBM-bound on reading x, so this compute is effectively free; no MXU.
    y = jnp.sum(x * w, axis=-1)                    # (TILE_B,) per-row dot products
    y = y.reshape(1, y.shape[0]) + b_ref[0, 0]     # lane-dense (1, TILE_B)
    o_ref[...] = y.astype(o_ref.dtype)


def _pick_tiling(batch, feat, dtype_bytes, x_tile_budget_bytes=8 * 1024 * 1024):
    """Choose (tile_b, padded_b).

    tile_b is a multiple of 128 when the batch is split into multiple tiles
    (keeps both the x block sublane-aligned and the lane-dense output block
    128-divisible), and the double-buffered x tile (2 * tile_b * D * bytes)
    stays within a conservative budget that fits all TPU generations.
    """
    b8 = ((batch + 7) // 8) * 8                       # sublane granularity
    max_rows = max(128, x_tile_budget_bytes // (2 * max(feat, 1) * dtype_bytes))
    tile = min(2048, max(128, (max_rows // 128) * 128))
    if b8 <= tile:
        return b8, b8                                 # single tile == full batch
    padded = ((b8 + tile - 1) // tile) * tile
    return tile, padded


def perceptron_forward(x, weight, bias):
    """x: [B, D], weight: [1, D] (PyTorch nn.Linear layout), bias: [1] -> [B, 1]."""
    B, D = x.shape
    tile_b, padded_b = _pick_tiling(B, D, dtype_bytes=jnp.dtype(x.dtype).itemsize)

    x_in = x
    if padded_b != B:
        x_in = jnp.pad(x_in, ((0, padded_b - B), (0, 0)))

    w = weight.astype(x.dtype)                    # keep lane-dense [1, D]; no transpose
    b = bias.reshape(1, 1).astype(jnp.float32)    # scalar bias for SMEM

    n_tiles = padded_b // tile_b

    out = pl.pallas_call(
        perceptron_kernel,
        out_shape=jax.ShapeDtypeStruct((1, padded_b), jnp.float32),
        grid=(n_tiles,),
        in_specs=[
            pl.BlockSpec((tile_b, D), lambda i: (i, 0)),          # x: batch-tiled
            pl.BlockSpec((1, D), lambda i: (0, 0)),               # weight: resident
            pl.BlockSpec(memory_space=pltpu.MemorySpace.SMEM),    # bias: SMEM scalar
        ],
        out_specs=pl.BlockSpec((1, tile_b), lambda i: (0, i)),    # lane-dense output
        compiler_params=pltpu.CompilerParams(
            # Batch tiles are independent: shard across TensorCores on v7x;
            # harmless no-op on single-TC v5e/v6e.
            dimension_semantics=("parallel",),
        ),
    )(x_in, w, b)

    # TODO(synk): for very large D, add a K ("arbitrary") grid axis with a VMEM
    # partial-sum scratch; unnecessary at realistic perceptron feature widths.
    return out[0, :B].reshape(B, 1).astype(x.dtype)


if __name__ == "__main__":
    key = jax.random.PRNGKey(0)
    k_x, k_w, k_b = jax.random.split(key, 3)

    batch, input_dim = 8, 32

    # Deterministic parameter init mimicking nn.Linear's U(-1/sqrt(D), 1/sqrt(D)).
    bound = 1.0 / (input_dim ** 0.5)
    weight = jax.random.uniform(k_w, (1, input_dim), jnp.float32, -bound, bound)
    bias = jax.random.uniform(k_b, (1,), jnp.float32, -bound, bound)

    x = jax.random.normal(k_x, (batch, input_dim), jnp.float32)

    y = perceptron_forward(x, weight, bias)
    jax.block_until_ready(y)

    # Reference check against plain JAX (same math as torch nn.Linear).
    y_ref = x @ weight.T + bias
    assert y.shape == (batch, 1)
    assert jnp.allclose(y, y_ref, atol=1e-5, rtol=1e-5)

    print("KERNEL_OK")
</pallas_src>

<mosaic_0001>
module attributes {stable_mosaic.version = 11 : i64} {
  func.func @perceptron_kernel(%arg0: i32, %arg1: memref<8x32xf32, #tpu.memory_space<vmem>>, %arg2: memref<1x32xf32, #tpu.memory_space<vmem>>, %arg3: memref<1x1xf32, #tpu.memory_space<smem>>, %arg4: memref<1x8xf32, #tpu.memory_space<vmem>>) attributes {dimension_semantics = [#tpu.dimension_semantics<parallel>], iteration_bounds = array<i64: 1>, scalar_prefetch = 0 : i64, scratch_operands = 0 : i64, tpu.core_type = #tpu.core_type<tc>, window_params = [{transform_indices = @transform_0, window_bounds = array<i64: 8, 32>}, {pipeline_mode = #tpu.pipeline_mode<synchronous>, transform_indices = @transform_1, window_bounds = array<i64: 1, 32>}, {transform_indices = @transform_2, window_bounds = array<i64: 1, 1>}, {transform_indices = @transform_3, window_bounds = array<i64: 1, 8>}]} {
    %c0 = arith.constant 0 : index
    %c0_0 = arith.constant 0 : index
    %0 = vector.load %arg1[%c0, %c0_0] : memref<8x32xf32, #tpu.memory_space<vmem>>, vector<8x32xf32>
    %c0_1 = arith.constant 0 : index
    %c0_2 = arith.constant 0 : index
    %1 = vector.load %arg2[%c0_1, %c0_2] : memref<1x32xf32, #tpu.memory_space<vmem>>, vector<1x32xf32>
    %2 = vector.broadcast %1 : vector<1x32xf32> to vector<8x32xf32>
    %3 = arith.mulf %0, %2 : vector<8x32xf32>
    %cst = arith.constant dense<0.000000e+00> : vector<8xf32>
    %4 = vector.multi_reduction <add>, %3, %cst [1] : vector<8x32xf32> to vector<8xf32>
    %5 = vector.shape_cast %4 : vector<8xf32> to vector<1x8xf32>
    %c0_3 = arith.constant 0 : index
    %c0_4 = arith.constant 0 : index
    %6 = memref.load %arg3[%c0_3, %c0_4] : memref<1x1xf32, #tpu.memory_space<smem>>
    %7 = vector.broadcast %6 : f32 to vector<1x8xf32>
    %8 = arith.addf %5, %7 : vector<1x8xf32>
    %c0_5 = arith.constant 0 : index
    %c0_6 = arith.constant 0 : index
    %9 = vector.load %arg4[%c0_5, %c0_6] : memref<1x8xf32, #tpu.memory_space<vmem>>, vector<1x8xf32>
    tpu.vector_store %arg4[%c0_5, %c0_6], %8 {strides = array<i32>} : memref<1x8xf32, #tpu.memory_space<vmem>>, vector<1x8xf32>,
    return
  }
  func.func @transform_0(%arg0: i32) -> (i32, i32) {
    %c0_i32 = arith.constant 0 : i32
    %c0_i32_0 = arith.constant 0 : i32
    return %arg0, %c0_i32 : i32, i32
  }
  func.func @transform_1(%arg0: i32) -> (i32, i32) {
    %c0_i32 = arith.constant 0 : i32
    %c0_i32_0 = arith.constant 0 : i32
    %c0_i32_1 = arith.constant 0 : i32
    return %c0_i32, %c0_i32_0 : i32, i32
  }
  func.func @transform_2(%arg0: i32) -> (i32, i32) {
    %c0_i32 = arith.constant 0 : i32
    %c0_i32_0 = arith.constant 0 : i32
    %c0_i32_1 = arith.constant 0 : i32
    return %c0_i32, %c0_i32_0 : i32, i32
  }
  func.func @transform_3(%arg0: i32) -> (i32, i32) {
    %c0_i32 = arith.constant 0 : i32
    %c0_i32_0 = arith.constant 0 : i32
    return %c0_i32, %arg0 : i32, i32
  }
}

</mosaic_0001>

<llo_original>
// kernel: tpu_custom_call.1
$region0: #{tpu_custom_call.1}
  #allocation0 [shape = 'u32[]', space=smem, size = 0x4, offset = 0x4, fixed_abs, tag = 'smem constant byte address 0x4 - core index']
  #allocation1 [shape = 'u32[72,128]{1,0:T(1,128)}', space=vmem, size = 0x9000, scoped, tag = 'internal scratch']
  #allocation2 [shape = 'f32[1,1]{1,0:T(1,128)S(6)}', space=smem, size = 0x200, scoped, tag = 'scoped memory for tpu_custom_call.1']
  %s0 = inlined_call_operand.hbm [shape: f32[8,32], index: 0, kind: input, shape index: {}]
  %s1 = inlined_call_operand.vmem [shape: f32[1,32], index: 1, kind: input, shape index: {}]
  %s2 = inlined_call_operand.<no memory space> [shape: f32[1,1], index: 2, kind: input, shape index: {}]
  %s3 = inlined_call_operand.hbm [shape: f32[1,8], index: 3, kind: output, shape index: {}]
  %s4 = sld [smem:[#allocation0]]
  $region26: #{tpu_custom_call.1} parent=0
    _
  %s6 = ssub.s32 1, %s4
  %s7 = scalar_select 0, %s6, %s4
  %8 = sst [smem:[#allocation2]] %s2
  $region1: #{tpu_custom_call.1} parent=0
    #allocation3 [shape = 'u8[4096]{0}', space=vmem, size = 0x1000, scoped, tag = 'input window, operand 0, single buffered']
    #allocation4 [shape = 's32[1]{0}', space=sflag, size = 0x4, scoped, tag = 'scoped memory for tpu_custom_call.1']
    #allocation5 [shape = 's32[1]{0}', space=sflag, size = 0x4, scoped, tag = 'scoped memory for tpu_custom_call.1']
    #allocation6 [shape = 'u8[512]{0}', space=vmem, size = 0x400, scoped, tag = 'output window, operand 0, single buffered']
    %9 = vsyncpa [#allocation4], 0
    %10 = vsyncpa [#allocation5], 0
    // Predicated region
    $region2: #{tpu_custom_call.1} parent=1 // pred_check
      _
    $region3: #{tpu_custom_call.1} parent=1 // pred_check_branch
      %12 = sbr.rel (0) target = $region5
    $region4: #{tpu_custom_call.1} parent=1 // pred_region
      %14 = vsyncadd [#allocation4], 0
      %s16 = sshll.u32 %s0, 4
      %s17 = int_to_ptr.hbm [resolvable:$true] %s16
      %s18 = sshll.u32 [#allocation3], 4
      %s19 = int_to_ptr.vmem [resolvable:$true] %s18
      %21 = dma.hbm_to_vmem [thread:$0]  %s17, 128, %s19, [#allocation4]
    $region5: #{tpu_custom_call.1} parent=1 // pred_fallthru
      _
    // Predicated region
    $region6: #{tpu_custom_call.1} parent=1 // pred_check
      _
    $region7: #{tpu_custom_call.1} parent=1 // pred_check_branch
      %23 = sbr.rel (0) target = $region9
    $region8: #{tpu_custom_call.1} parent=1 // pred_region
      _
    $region9: #{tpu_custom_call.1} parent=1 // pred_fallthru
      _
    // Predicated region
    $region10: #{tpu_custom_call.1} parent=1 // pred_check
      _
    $region11: #{tpu_custom_call.1} parent=1 // pred_check_branch
      %25 = sbr.rel (0) target = $region13
    $region12: #{tpu_custom_call.1} parent=1 // pred_region
      _
    $region13: #{tpu_custom_call.1} parent=1 // pred_fallthru
      _
    // Predicated region
    $region14: #{tpu_custom_call.1} parent=1 // pred_check
      _
    $region15: #{tpu_custom_call.1} parent=1 // pred_check_branch
      %27 = sbr.rel (0) target = $region17
    $region16: #{tpu_custom_call.1} parent=1 // pred_region
      %29 = dma.done [#allocation4], 128
    $region17: #{tpu_custom_call.1} parent=1 // pred_fallthru
      _
    %v30 = vld [vmem:[#allocation3] sm:$0xff]
    %v31 = vld [vmem:[%s1] sm:$0x1]
    %v33 = vperm.slane %v31, 0
    %v35 = vmul.f32 %v30, %v33
    %vm36 = vcmask 261120
    %v37 = vsel %vm36, %v35, 0.0
    %38 = vadd.xlane.f32.xlu0 %v37
    %v39 = vpop.xlane.xlu0 %38
    %s40 = sld [smem:[#allocation2]]
    %v41 = vstv %s40
    %v42 = vadd.f32 %v39, %v41
    %v44 = vlaneseq
    %v45 = vand.u32 %v44, 127
    %v46 = vperm.slane %v42, %v45
    %vm48 = vcmask 57344
    %49 = vst.msk [vmem:[#allocation6] sm:$0x1] %vm48, %v46
    // Predicated region
    $region18: #{tpu_custom_call.1} parent=1 // pred_check
      _
    $region19: #{tpu_custom_call.1} parent=1 // pred_check_branch
      %51 = sbr.rel (0) target = $region21
    $region20: #{tpu_custom_call.1} parent=1 // pred_region
      %53 = vsyncadd [#allocation5], 0
      %s55 = sshll.u32 [#allocation6], 4
      %s56 = int_to_ptr.vmem [resolvable:$true] %s55
      %s57 = sshll.u32 %s3, 4
      %s58 = int_to_ptr.hbm [resolvable:$true] %s57
      %60 = dma.vmem_to_hbm [thread:$0]  %s56, 16, %s58, [#allocation5]
    $region21: #{tpu_custom_call.1} parent=1 // pred_fallthru
      _
    // Predicated region
    $region22: #{tpu_custom_call.1} parent=1 // pred_check
      _
    $region23: #{tpu_custom_call.1} parent=1 // pred_check_branch
      %62 = sbr.rel (0) target = $region25
    $region24: #{tpu_custom_call.1} parent=1 // pred_region
      %64 = dma.done [#allocation5], 16
    $region25: #{tpu_custom_call.1} parent=1 // pred_fallthru
      _
    %65 = vsyncpa [#allocation4], 1
    %66 = vsyncpa [#allocation5], 1

</llo_original>
